<compile_context>
chip_gen: v6e
topology: v6e:2x2x1
jax: 0.10.0
libtpu: 0.0.40
codegen_flags: <defaults>
</compile_context>

<pallas_src>
import functools

import jax
import jax.numpy as jnp
from jax.experimental import pallas as pl
from jax.experimental.pallas import tpu as pltpu

SUBLANE = 8


def _round_up(n, m):
    return ((n + m - 1) // m) * m


def _goal_decoder_kernel(num_layers, x_ref, *refs):
    """Fused MLP forward for one batch tile.

    refs = (w0, b0, w1, b1, ..., w_{L-1}, b_{L-1}, out_ref).
    Layers 0..L-2 are followed by ReLU; the last layer (goal_head) is linear.
    """
    out_ref = refs[-1]
    params = refs[:-1]

    h = x_ref[...]
    for i in range(num_layers):
        w = params[2 * i][...]
        b = params[2 * i + 1][...].astype(jnp.float32)
        # MXU in the stored (bf16) dtype, accumulate in f32; bias/ReLU on the
        # f32 accumulator.
        acc = jnp.dot(h.astype(w.dtype), w, preferred_element_type=jnp.float32) + b
        if i < num_layers - 1:
            # Keep the inter-layer activation in bf16: it feeds the next MXU
            # anyway and halves vreg/VMEM pressure at large batch tiles.
            h = jnp.maximum(acc, 0.0).astype(w.dtype)
        else:
            out_ref[...] = acc.astype(out_ref.dtype)


def prepare_goal_decoder_params(weights, biases, *, param_dtype=jnp.bfloat16):
    """One-time parameter preparation (hoisted out of the per-call path).

    weights[i]: [d_i, d_{i+1}] (transposed vs PyTorch's [out, in]);
    biases[i]:  [d_{i+1}].
    Weights are cast to the native MXU dtype (bf16); biases stay f32 (they are
    added to the f32 accumulator) and are reshaped to 2-D for TPU layout.
    """
    pw = [jnp.asarray(w, param_dtype) for w in weights]
    pb = [jnp.asarray(b, jnp.float32).reshape(1, -1) for b in biases]
    return pw, pb


def goal_decoder_forward(x, prepared_params, *, tile_b=1024):
    """x: [B, in_dim]; prepared_params from prepare_goal_decoder_params().

    Returns [B, out_dim] == goal_head(relu(...relu(in_fc(x))...)).
    """
    weights, biases = prepared_params
    num_layers = len(weights)
    B, in_dim = x.shape
    out_dim = weights[-1].shape[1]
    out_dtype = x.dtype

    # Batch tiling: large tiles for HBM-roofline efficiency, but at most half
    # the (sublane-rounded) batch so the grid has >= 2 steps for v7x's 2 TCs.
    b8 = _round_up(B, SUBLANE)
    tb = min(_round_up(tile_b, SUBLANE), _round_up(pl.cdiv(b8, 2), SUBLANE))
    tb = max(tb, SUBLANE)
    Bp = _round_up(B, tb)
    grid = (Bp // tb,)

    # Only the batch dim ever needs padding, and only when B % tb != 0.
    xp = x if Bp == B else jnp.zeros((Bp, in_dim), x.dtype).at[:B].set(x)

    args = [xp]
    for w, b in zip(weights, biases):
        args.append(w)
        args.append(b)

    # Activations stream along batch; weights/biases are VMEM-resident
    # (constant index_map -> fetched once, reused for every grid step).
    def _make_specs(single_buffer_params):
        in_specs = [pl.BlockSpec((tb, in_dim), lambda i: (i, 0))]
        for w, b in zip(weights, biases):
            if single_buffer_params:
                in_specs.append(
                    pl.BlockSpec(w.shape, lambda i: (0, 0), pipeline_mode=pl.Buffered(1))
                )
                in_specs.append(
                    pl.BlockSpec(b.shape, lambda i: (0, 0), pipeline_mode=pl.Buffered(1))
                )
            else:
                in_specs.append(pl.BlockSpec(w.shape, lambda i: (0, 0)))
                in_specs.append(pl.BlockSpec(b.shape, lambda i: (0, 0)))
        out_spec = pl.BlockSpec((tb, out_dim), lambda i: (i, 0))
        return in_specs, out_spec

    # Explicit scoped-VMEM budget: resident params (x2 buffers worst case) +
    # double-buffered activation/output tiles + f32 intermediate, with headroom.
    param_bytes = sum(a.size * a.dtype.itemsize for a in args[1:])
    tile_bytes = tb * in_dim * x.dtype.itemsize + tb * out_dim * jnp.dtype(out_dtype).itemsize
    inter_bytes = tb * max(w.shape[1] for w in weights) * 4
    vmem_limit = int(
        min(64 << 20, max(16 << 20, 2 * (param_bytes + 2 * tile_bytes + inter_bytes) + (4 << 20)))
    )

    flops = 2 * Bp * sum(w.shape[0] * w.shape[1] for w in weights)
    bytes_accessed = (
        xp.size * xp.dtype.itemsize
        + param_bytes
        + Bp * out_dim * jnp.dtype(out_dtype).itemsize
    )
    cost = pl.CostEstimate(flops=flops, transcendentals=0, bytes_accessed=bytes_accessed)

    def _run(single_buffer_params):
        in_specs, out_spec = _make_specs(single_buffer_params)
        return pl.pallas_call(
            functools.partial(_goal_decoder_kernel, num_layers),
            out_shape=jax.ShapeDtypeStruct((Bp, out_dim), out_dtype),
            grid=grid,
            in_specs=in_specs,
            out_specs=out_spec,
            compiler_params=pltpu.CompilerParams(
                dimension_semantics=("parallel",),  # shard batch across v7x's 2 TCs
                vmem_limit_bytes=vmem_limit,
            ),
            cost_estimate=cost,
        )(*args)

    try:
        # Params have constant index_maps -> single-buffer them to halve their
        # resident VMEM (matters for wide configs on v7x's 64 MiB VMEM).
        out_padded = _run(single_buffer_params=True)
    except Exception:
        # TODO(synk): pipeline_mode=pl.Buffered(1) unsupported on this JAX build;
        # fall back to default double-buffered parameter blocks.
        out_padded = _run(single_buffer_params=False)

    return out_padded if Bp == B else out_padded[:B]


def _init_goal_decoder_params(key, in_dim, out_dim, hidden_layers):
    """Deterministic synthetic init matching GoalDecoder's layer shapes.

    Layer chain used in GoalDecoder.forward:
      in_fc:      in_dim -> hidden_layers[0]             (+ ReLU)
      hidden[i]:  hidden_layers[i] -> hidden_layers[i+1] (+ ReLU)
      goal_head:  hidden_layers[-1] -> out_dim           (no activation)
    (out_right_head / out_left_head exist in the module but are unused by
     GoalDecoder.forward, so they are not materialized here.)
    """
    dims = [in_dim] + list(hidden_layers) + [out_dim]
    weights, biases = [], []
    for i in range(len(dims) - 1):
        key, kw, kb = jax.random.split(key, 3)
        bound = 1.0 / jnp.sqrt(jnp.float32(dims[i]))
        w = jax.random.uniform(kw, (dims[i], dims[i + 1]), jnp.float32, -bound, bound)
        b = jax.random.uniform(kb, (dims[i + 1],), jnp.float32, -bound, bound)
        weights.append(w)
        biases.append(b)
    return weights, biases


def _reference_forward(x, prepared_params):
    """Pure-JAX reference using the same prepared (bf16) params / compute path."""
    weights, biases = prepared_params
    h = x
    for i, (w, b) in enumerate(zip(weights, biases)):
        h = jnp.dot(h.astype(w.dtype), w, preferred_element_type=jnp.float32) + b
        if i < len(weights) - 1:
            h = jnp.maximum(h, 0.0).astype(w.dtype)
    return h.astype(x.dtype)


if __name__ == "__main__":
    # Small shapes consistent with the module: batch=8, in_dim=32,
    # hidden_layers=[64, 64], out_dim=16.
    batch, in_dim, out_dim = 8, 32, 16
    hidden_layers = [64, 64]

    key = jax.random.PRNGKey(0)
    key, kx = jax.random.split(key)
    x = jax.random.normal(kx, (batch, in_dim), jnp.float32)

    raw_w, raw_b = _init_goal_decoder_params(key, in_dim, out_dim, hidden_layers)
    params = prepare_goal_decoder_params(raw_w, raw_b)  # one-time, hoisted prep

    out = goal_decoder_forward(x, params)
    out = jax.block_until_ready(out)

    ref = _reference_forward(x, params)
    assert out.shape == (batch, out_dim), out.shape
    assert jnp.allclose(out, ref, atol=1e-2, rtol=1e-2), "mismatch vs reference"

    print("KERNEL_OK")
</pallas_src>

<mosaic_0001>
module attributes {stable_mosaic.version = 11 : i64} {
  func.func @_goal_decoder_kernel(%arg0: i32, %arg1: memref<8x32xf32, #tpu.memory_space<vmem>>, %arg2: memref<32x64xbf16, #tpu.memory_space<vmem>>, %arg3: memref<1x64xf32, #tpu.memory_space<vmem>>, %arg4: memref<64x64xbf16, #tpu.memory_space<vmem>>, %arg5: memref<1x64xf32, #tpu.memory_space<vmem>>, %arg6: memref<64x16xbf16, #tpu.memory_space<vmem>>, %arg7: memref<1x16xf32, #tpu.memory_space<vmem>>, %arg8: memref<8x16xf32, #tpu.memory_space<vmem>>) attributes {dimension_semantics = [#tpu.dimension_semantics<parallel>], iteration_bounds = array<i64: 1>, scalar_prefetch = 0 : i64, scratch_operands = 0 : i64, tpu.core_type = #tpu.core_type<tc>, window_params = [{transform_indices = @transform_0, window_bounds = array<i64: 8, 32>}, {pipeline_mode = #tpu.pipeline_mode<synchronous>, transform_indices = @transform_1, window_bounds = array<i64: 32, 64>}, {pipeline_mode = #tpu.pipeline_mode<synchronous>, transform_indices = @transform_2, window_bounds = array<i64: 1, 64>}, {pipeline_mode = #tpu.pipeline_mode<synchronous>, transform_indices = @transform_3, window_bounds = array<i64: 64, 64>}, {pipeline_mode = #tpu.pipeline_mode<synchronous>, transform_indices = @transform_4, window_bounds = array<i64: 1, 64>}, {pipeline_mode = #tpu.pipeline_mode<synchronous>, transform_indices = @transform_5, window_bounds = array<i64: 64, 16>}, {pipeline_mode = #tpu.pipeline_mode<synchronous>, transform_indices = @transform_6, window_bounds = array<i64: 1, 16>}, {transform_indices = @transform_7, window_bounds = array<i64: 8, 16>}]} {
    %c0 = arith.constant 0 : index
    %c0_0 = arith.constant 0 : index
    %0 = vector.load %arg1[%c0, %c0_0] : memref<8x32xf32, #tpu.memory_space<vmem>>, vector<8x32xf32>
    %c0_1 = arith.constant 0 : index
    %c0_2 = arith.constant 0 : index
    %1 = vector.load %arg2[%c0_1, %c0_2] : memref<32x64xbf16, #tpu.memory_space<vmem>>, vector<32x64xbf16>
    %c0_3 = arith.constant 0 : index
    %c0_4 = arith.constant 0 : index
    %2 = vector.load %arg3[%c0_3, %c0_4] : memref<1x64xf32, #tpu.memory_space<vmem>>, vector<1x64xf32>
    %3 = arith.truncf %0 : vector<8x32xf32> to vector<8x32xbf16>
    %cst = arith.constant dense<0.000000e+00> : vector<8x64xf32>
    %4 = tpu.matmul %3, %1, %cst {dimension_numbers = #tpu.dot_dimension_numbers<[1], [0], [0], [1], [0, 0, 1, 1], [], []>} : vector<8x32xbf16>, vector<32x64xbf16>, vector<8x64xf32> -> vector<8x64xf32>
    %5 = vector.broadcast %2 : vector<1x64xf32> to vector<8x64xf32>
    %6 = arith.addf %4, %5 : vector<8x64xf32>
    %cst_5 = arith.constant 0.000000e+00 : f32
    %7 = vector.broadcast %cst_5 : f32 to vector<8x64xf32>
    %8 = arith.maximumf %6, %7 : vector<8x64xf32>
    %9 = arith.truncf %8 : vector<8x64xf32> to vector<8x64xbf16>
    %c0_6 = arith.constant 0 : index
    %c0_7 = arith.constant 0 : index
    %10 = vector.load %arg4[%c0_6, %c0_7] : memref<64x64xbf16, #tpu.memory_space<vmem>>, vector<64x64xbf16>
    %c0_8 = arith.constant 0 : index
    %c0_9 = arith.constant 0 : index
    %11 = vector.load %arg5[%c0_8, %c0_9] : memref<1x64xf32, #tpu.memory_space<vmem>>, vector<1x64xf32>
    %cst_10 = arith.constant dense<0.000000e+00> : vector<8x64xf32>
    %12 = tpu.matmul %9, %10, %cst_10 {dimension_numbers = #tpu.dot_dimension_numbers<[1], [0], [0], [1], [0, 0, 1, 1], [], []>} : vector<8x64xbf16>, vector<64x64xbf16>, vector<8x64xf32> -> vector<8x64xf32>
    %13 = vector.broadcast %11 : vector<1x64xf32> to vector<8x64xf32>
    %14 = arith.addf %12, %13 : vector<8x64xf32>
    %cst_11 = arith.constant 0.000000e+00 : f32
    %15 = vector.broadcast %cst_11 : f32 to vector<8x64xf32>
    %16 = arith.maximumf %14, %15 : vector<8x64xf32>
    %17 = arith.truncf %16 : vector<8x64xf32> to vector<8x64xbf16>
    %c0_12 = arith.constant 0 : index
    %c0_13 = arith.constant 0 : index
    %18 = vector.load %arg6[%c0_12, %c0_13] : memref<64x16xbf16, #tpu.memory_space<vmem>>, vector<64x16xbf16>
    %c0_14 = arith.constant 0 : index
    %c0_15 = arith.constant 0 : index
    %19 = vector.load %arg7[%c0_14, %c0_15] : memref<1x16xf32, #tpu.memory_space<vmem>>, vector<1x16xf32>
    %cst_16 = arith.constant dense<0.000000e+00> : vector<8x16xf32>
    %20 = tpu.matmul %17, %18, %cst_16 {dimension_numbers = #tpu.dot_dimension_numbers<[1], [0], [0], [1], [0, 0, 1, 1], [], []>} : vector<8x64xbf16>, vector<64x16xbf16>, vector<8x16xf32> -> vector<8x16xf32>
    %21 = vector.broadcast %19 : vector<1x16xf32> to vector<8x16xf32>
    %22 = arith.addf %20, %21 : vector<8x16xf32>
    %c0_17 = arith.constant 0 : index
    %c0_18 = arith.constant 0 : index
    %23 = vector.load %arg8[%c0_17, %c0_18] : memref<8x16xf32, #tpu.memory_space<vmem>>, vector<8x16xf32>
    tpu.vector_store %arg8[%c0_17, %c0_18], %22 {strides = array<i32>} : memref<8x16xf32, #tpu.memory_space<vmem>>, vector<8x16xf32>,
    return
  }
  func.func @transform_0(%arg0: i32) -> (i32, i32) {
    %c0_i32 = arith.constant 0 : i32
    %c0_i32_0 = arith.constant 0 : i32
    return %arg0, %c0_i32 : i32, i32
  }
  func.func @transform_1(%arg0: i32) -> (i32, i32) {
    %c0_i32 = arith.constant 0 : i32
    %c0_i32_0 = arith.constant 0 : i32
    %c0_i32_1 = arith.constant 0 : i32
    return %c0_i32, %c0_i32_0 : i32, i32
  }
  func.func @transform_2(%arg0: i32) -> (i32, i32) {
    %c0_i32 = arith.constant 0 : i32
    %c0_i32_0 = arith.constant 0 : i32
    %c0_i32_1 = arith.constant 0 : i32
    return %c0_i32, %c0_i32_0 : i32, i32
  }
  func.func @transform_3(%arg0: i32) -> (i32, i32) {
    %c0_i32 = arith.constant 0 : i32
    %c0_i32_0 = arith.constant 0 : i32
    %c0_i32_1 = arith.constant 0 : i32
    return %c0_i32, %c0_i32_0 : i32, i32
  }
  func.func @transform_4(%arg0: i32) -> (i32, i32) {
    %c0_i32 = arith.constant 0 : i32
    %c0_i32_0 = arith.constant 0 : i32
    %c0_i32_1 = arith.constant 0 : i32
    return %c0_i32, %c0_i32_0 : i32, i32
  }
  func.func @transform_5(%arg0: i32) -> (i32, i32) {
    %c0_i32 = arith.constant 0 : i32
    %c0_i32_0 = arith.constant 0 : i32
    %c0_i32_1 = arith.constant 0 : i32
    return %c0_i32, %c0_i32_0 : i32, i32
  }
  func.func @transform_6(%arg0: i32) -> (i32, i32) {
    %c0_i32 = arith.constant 0 : i32
    %c0_i32_0 = arith.constant 0 : i32
    %c0_i32_1 = arith.constant 0 : i32
    return %c0_i32, %c0_i32_0 : i32, i32
  }
  func.func @transform_7(%arg0: i32) -> (i32, i32) {
    %c0_i32 = arith.constant 0 : i32
    %c0_i32_0 = arith.constant 0 : i32
    return %arg0, %c0_i32 : i32, i32
  }
}

module attributes {stable_mosaic.version = 11 : i64} {
  func.func @_goal_decoder_kernel(%arg0: i32, %arg1: memref<8x32xf32, #tpu.memory_space<vmem>>, %arg2: memref<32x64xbf16, #tpu.memory_space<vmem>>, %arg3: memref<1x64xf32, #tpu.memory_space<vmem>>, %arg4: memref<64x64xbf16, #tpu.memory_space<vmem>>, %arg5: memref<1x64xf32, #tpu.memory_space<vmem>>, %arg6: memref<64x16xbf16, #tpu.memory_space<vmem>>, %arg7: memref<1x16xf32, #tpu.memory_space<vmem>>, %arg8: memref<8x16xf32, #tpu.memory_space<vmem>>) attributes {dimension_semantics = [#tpu.dimension_semantics<parallel>], iteration_bounds = array<i64: 1>, scalar_prefetch = 0 : i64, scratch_operands = 0 : i64, tpu.core_type = #tpu.core_type<tc>, window_params = [{transform_indices = @transform_0, window_bounds = array<i64: 8, 32>}, {pipeline_mode = #tpu.pipeline_mode<synchronous>, transform_indices = @transform_1, window_bounds = array<i64: 32, 64>}, {pipeline_mode = #tpu.pipeline_mode<synchronous>, transform_indices = @transform_2, window_bounds = array<i64: 1, 64>}, {pipeline_mode = #tpu.pipeline_mode<synchronous>, transform_indices = @transform_3, window_bounds = array<i64: 64, 64>}, {pipeline_mode = #tpu.pipeline_mode<synchronous>, transform_indices = @transform_4, window_bounds = array<i64: 1, 64>}, {pipeline_mode = #tpu.pipeline_mode<synchronous>, transform_indices = @transform_5, window_bounds = array<i64: 64, 16>}, {pipeline_mode = #tpu.pipeline_mode<synchronous>, transform_indices = @transform_6, window_bounds = array<i64: 1, 16>}, {transform_indices = @transform_7, window_bounds = array<i64: 8, 16>}]} {
    %c0 = arith.constant 0 : index
    %c0_0 = arith.constant 0 : index
    %0 = vector.load %arg1[%c0, %c0_0] : memref<8x32xf32, #tpu.memory_space<vmem>>, vector<8x32xf32>
    %c0_1 = arith.constant 0 : index
    %c0_2 = arith.constant 0 : index
    %1 = vector.load %arg2[%c0_1, %c0_2] : memref<32x64xbf16, #tpu.memory_space<vmem>>, vector<32x64xbf16>
    %c0_3 = arith.constant 0 : index
    %c0_4 = arith.constant 0 : index
    %2 = vector.load %arg3[%c0_3, %c0_4] : memref<1x64xf32, #tpu.memory_space<vmem>>, vector<1x64xf32>
    %3 = arith.truncf %0 : vector<8x32xf32> to vector<8x32xbf16>
    %cst = arith.constant dense<0.000000e+00> : vector<8x64xf32>
    %4 = tpu.matmul %3, %1, %cst {dimension_numbers = #tpu.dot_dimension_numbers<[1], [0], [0], [1], [0, 0, 1, 1], [], []>} : vector<8x32xbf16>, vector<32x64xbf16>, vector<8x64xf32> -> vector<8x64xf32>
    %5 = vector.broadcast %2 : vector<1x64xf32> to vector<8x64xf32>
    %6 = arith.addf %4, %5 : vector<8x64xf32>
    %cst_5 = arith.constant 0.000000e+00 : f32
    %7 = vector.broadcast %cst_5 : f32 to vector<8x64xf32>
    %8 = arith.maximumf %6, %7 : vector<8x64xf32>
    %9 = arith.truncf %8 : vector<8x64xf32> to vector<8x64xbf16>
    %c0_6 = arith.constant 0 : index
    %c0_7 = arith.constant 0 : index
    %10 = vector.load %arg4[%c0_6, %c0_7] : memref<64x64xbf16, #tpu.memory_space<vmem>>, vector<64x64xbf16>
    %c0_8 = arith.constant 0 : index
    %c0_9 = arith.constant 0 : index
    %11 = vector.load %arg5[%c0_8, %c0_9] : memref<1x64xf32, #tpu.memory_space<vmem>>, vector<1x64xf32>
    %cst_10 = arith.constant dense<0.000000e+00> : vector<8x64xf32>
    %12 = tpu.matmul %9, %10, %cst_10 {dimension_numbers = #tpu.dot_dimension_numbers<[1], [0], [0], [1], [0, 0, 1, 1], [], []>} : vector<8x64xbf16>, vector<64x64xbf16>, vector<8x64xf32> -> vector<8x64xf32>
    %13 = vector.broadcast %11 : vector<1x64xf32> to vector<8x64xf32>
    %14 = arith.addf %12, %13 : vector<8x64xf32>
    %cst_11 = arith.constant 0.000000e+00 : f32
    %15 = vector.broadcast %cst_11 : f32 to vector<8x64xf32>
    %16 = arith.maximumf %14, %15 : vector<8x64xf32>
    %17 = arith.truncf %16 : vector<8x64xf32> to vector<8x64xbf16>
    %c0_12 = arith.constant 0 : index
    %c0_13 = arith.constant 0 : index
    %18 = vector.load %arg6[%c0_12, %c0_13] : memref<64x16xbf16, #tpu.memory_space<vmem>>, vector<64x16xbf16>
    %c0_14 = arith.constant 0 : index
    %c0_15 = arith.constant 0 : index
    %19 = vector.load %arg7[%c0_14, %c0_15] : memref<1x16xf32, #tpu.memory_space<vmem>>, vector<1x16xf32>
    %cst_16 = arith.constant dense<0.000000e+00> : vector<8x16xf32>
    %20 = tpu.matmul %17, %18, %cst_16 {dimension_numbers = #tpu.dot_dimension_numbers<[1], [0], [0], [1], [0, 0, 1, 1], [], []>} : vector<8x64xbf16>, vector<64x16xbf16>, vector<8x16xf32> -> vector<8x16xf32>
    %21 = vector.broadcast %19 : vector<1x16xf32> to vector<8x16xf32>
    %22 = arith.addf %20, %21 : vector<8x16xf32>
    %c0_17 = arith.constant 0 : index
    %c0_18 = arith.constant 0 : index
    %23 = vector.load %arg8[%c0_17, %c0_18] : memref<8x16xf32, #tpu.memory_space<vmem>>, vector<8x16xf32>
    tpu.vector_store %arg8[%c0_17, %c0_18], %22 {strides = array<i32>} : memref<8x16xf32, #tpu.memory_space<vmem>>, vector<8x16xf32>,
    return
  }
  func.func @transform_0(%arg0: i32) -> (i32, i32) {
    %c0_i32 = arith.constant 0 : i32
    %c0_i32_0 = arith.constant 0 : i32
    return %arg0, %c0_i32 : i32, i32
  }
  func.func @transform_1(%arg0: i32) -> (i32, i32) {
    %c0_i32 = arith.constant 0 : i32
    %c0_i32_0 = arith.constant 0 : i32
    %c0_i32_1 = arith.constant 0 : i32
    return %c0_i32, %c0_i32_0 : i32, i32
  }
  func.func @transform_2(%arg0: i32) -> (i32, i32) {
    %c0_i32 = arith.constant 0 : i32
    %c0_i32_0 = arith.constant 0 : i32
    %c0_i32_1 = arith.constant 0 : i32
    return %c0_i32, %c0_i32_0 : i32, i32
  }
  func.func @transform_3(%arg0: i32) -> (i32, i32) {
    %c0_i32 = arith.constant 0 : i32
    %c0_i32_0 = arith.constant 0 : i32
    %c0_i32_1 = arith.constant 0 : i32
    return %c0_i32, %c0_i32_0 : i32, i32
  }
  func.func @transform_4(%arg0: i32) -> (i32, i32) {
    %c0_i32 = arith.constant 0 : i32
    %c0_i32_0 = arith.constant 0 : i32
    %c0_i32_1 = arith.constant 0 : i32
    return %c0_i32, %c0_i32_0 : i32, i32
  }
  func.func @transform_5(%arg0: i32) -> (i32, i32) {
    %c0_i32 = arith.constant 0 : i32
    %c0_i32_0 = arith.constant 0 : i32
    %c0_i32_1 = arith.constant 0 : i32
    return %c0_i32, %c0_i32_0 : i32, i32
  }
  func.func @transform_6(%arg0: i32) -> (i32, i32) {
    %c0_i32 = arith.constant 0 : i32
    %c0_i32_0 = arith.constant 0 : i32
    %c0_i32_1 = arith.constant 0 : i32
    return %c0_i32, %c0_i32_0 : i32, i32
  }
  func.func @transform_7(%arg0: i32) -> (i32, i32) {
    %c0_i32 = arith.constant 0 : i32
    %c0_i32_0 = arith.constant 0 : i32
    return %arg0, %c0_i32 : i32, i32
  }
}

</mosaic_0001>

<llo_original>
// kernel: tpu_custom_call.1
$region0: #{tpu_custom_call.1}
  #allocation0 [shape = 'u32[]', space=smem, size = 0x4, offset = 0x4, fixed_abs, tag = 'smem constant byte address 0x4 - core index']
  #allocation1 [shape = 'u32[144,128]{1,0:T(1,128)}', space=vmem, size = 0x12000, scoped, tag = 'internal scratch']
  %s0 = inlined_call_operand.vmem [shape: f32[8,32], index: 0, kind: input, shape index: {}]
  %s1 = inlined_call_operand.hbm [shape: bf16[32,64], index: 1, kind: input, shape index: {}]
  %s2 = inlined_call_operand.vmem [shape: f32[1,64], index: 2, kind: input, shape index: {}]
  %s3 = inlined_call_operand.vmem [shape: bf16[64,64], index: 3, kind: input, shape index: {}]
  %s4 = inlined_call_operand.hbm [shape: f32[1,64], index: 4, kind: input, shape index: {}]
  %s5 = inlined_call_operand.vmem [shape: bf16[64,16], index: 5, kind: input, shape index: {}]
  %s6 = inlined_call_operand.vmem [shape: f32[1,16], index: 6, kind: input, shape index: {}]
  %s7 = inlined_call_operand.hbm [shape: f32[8,16], index: 7, kind: output, shape index: {}]
  %s8 = sld [smem:[#allocation0]]
  $region46: #{tpu_custom_call.1} parent=0
    _
  %s10 = ssub.s32 1, %s8
  %s11 = scalar_select 0, %s10, %s8
  $region1: #{tpu_custom_call.1} parent=0
    #allocation2 [shape = 'u8[8192]{0}', space=vmem, size = 0x2000, scoped, tag = 'input window, operand 1, single buffered']
    #allocation3 [shape = 's32[1]{0}', space=sflag, size = 0x4, scoped, tag = 'scoped memory for tpu_custom_call.1']
    #allocation4 [shape = 's32[1]{0}', space=sflag, size = 0x4, scoped, tag = 'scoped memory for tpu_custom_call.1']
    #allocation5 [shape = 'u8[512]{0}', space=vmem, size = 0x400, scoped, tag = 'input window, operand 4, single buffered']
    #allocation6 [shape = 's32[1]{0}', space=sflag, size = 0x4, scoped, tag = 'scoped memory for tpu_custom_call.1']
    #allocation7 [shape = 'u8[4096]{0}', space=vmem, size = 0x1000, scoped, tag = 'output window, operand 0, single buffered']
    %12 = vsyncpa [#allocation3], 0
    %13 = vsyncpa [#allocation6], 0
    %14 = vsyncpa [#allocation4], 0
    // Predicated region
    $region2: #{tpu_custom_call.1} parent=1 // pred_check
      _
    $region3: #{tpu_custom_call.1} parent=1 // pred_check_branch
      %16 = sbr.rel (0) target = $region5
    $region4: #{tpu_custom_call.1} parent=1 // pred_region
      _
    $region5: #{tpu_custom_call.1} parent=1 // pred_fallthru
      _
    // Predicated region
    $region6: #{tpu_custom_call.1} parent=1 // pred_check
      _
    $region7: #{tpu_custom_call.1} parent=1 // pred_check_branch
      %18 = sbr.rel (0) target = $region9
    $region8: #{tpu_custom_call.1} parent=1 // pred_region
      %s20 = ssub.s32 256, 256
      %21 = vsyncadd [#allocation3], %s20
      %s22 = sshll.u32 [#allocation2], 4
      %s23 = int_to_ptr.vmem [resolvable:$true] %s22
      %28 = dma.hbm_to_vmem [thread:$0]  %s1, 256, %s23, [#allocation3], 64, 64, 4
    $region9: #{tpu_custom_call.1} parent=1 // pred_fallthru
      _
    // Predicated region
    $region10: #{tpu_custom_call.1} parent=1 // pred_check
      _
    $region11: #{tpu_custom_call.1} parent=1 // pred_check_branch
      %30 = sbr.rel (0) target = $region13
    $region12: #{tpu_custom_call.1} parent=1 // pred_region
      _
    $region13: #{tpu_custom_call.1} parent=1 // pred_fallthru
      _
    // Predicated region
    $region14: #{tpu_custom_call.1} parent=1 // pred_check
      _
    $region15: #{tpu_custom_call.1} parent=1 // pred_check_branch
      %32 = sbr.rel (0) target = $region17
    $region16: #{tpu_custom_call.1} parent=1 // pred_region
      _
    $region17: #{tpu_custom_call.1} parent=1 // pred_fallthru
      _
    // Predicated region
    $region18: #{tpu_custom_call.1} parent=1 // pred_check
      _
    $region19: #{tpu_custom_call.1} parent=1 // pred_check_branch
      %34 = sbr.rel (0) target = $region21
    $region20: #{tpu_custom_call.1} parent=1 // pred_region
      %s36 = ssub.s32 16, 16
      %37 = vsyncadd [#allocation6], %s36
      %s39 = sshll.u32 [#allocation5], 4
      %s40 = int_to_ptr.vmem [resolvable:$true] %s39
      %42 = dma.hbm_to_vmem [thread:$0]  %s4, 16, %s40, [#allocation6]
    $region21: #{tpu_custom_call.1} parent=1 // pred_fallthru
      _
    // Predicated region
    $region22: #{tpu_custom_call.1} parent=1 // pred_check
      _
    $region23: #{tpu_custom_call.1} parent=1 // pred_check_branch
      %44 = sbr.rel (0) target = $region25
    $region24: #{tpu_custom_call.1} parent=1 // pred_region
      _
    $region25: #{tpu_custom_call.1} parent=1 // pred_fallthru
      _
    // Predicated region
    $region26: #{tpu_custom_call.1} parent=1 // pred_check
      _
    $region27: #{tpu_custom_call.1} parent=1 // pred_check_branch
      %46 = sbr.rel (0) target = $region29
    $region28: #{tpu_custom_call.1} parent=1 // pred_region
      _
    $region29: #{tpu_custom_call.1} parent=1 // pred_fallthru
      _
    // Predicated region
    $region30: #{tpu_custom_call.1} parent=1 // pred_check
      _
    $region31: #{tpu_custom_call.1} parent=1 // pred_check_branch
      %48 = sbr.rel (0) target = $region33
    $region32: #{tpu_custom_call.1} parent=1 // pred_region
      %49 = dma.done [#allocation3], 256
    $region33: #{tpu_custom_call.1} parent=1 // pred_fallthru
      _
    // Predicated region
    $region34: #{tpu_custom_call.1} parent=1 // pred_check
      _
    $region35: #{tpu_custom_call.1} parent=1 // pred_check_branch
      %51 = sbr.rel (0) target = $region37
    $region36: #{tpu_custom_call.1} parent=1 // pred_region
      %52 = dma.done [#allocation6], 16
    $region37: #{tpu_custom_call.1} parent=1 // pred_fallthru
      _
    %v54 = vld [vmem:[%s0] sm:$0xff]
    %v55 = vld [vmem:[#allocation2] sm:$0xf]
    %v56 = vld [vmem:[#allocation2 + $0x4] sm:$0xf]
    %v57 = vld [vmem:[#allocation2 + $0x8] sm:$0xf]
    %v58 = vld [vmem:[#allocation2 + $0xc] sm:$0xf]
    %v59 = vld [vmem:[%s2] sm:$0x1]
    %v60 = vpack.c.bf16 %v54, %v54
    %v62 = vlaneseq
    %v63 = vshrl.u32 %v62, 7
    %v64 = vsub.s32 0, %v63
    %v65 = vrot.slane %v59, %v64
    %v71 = vunpack.c.l.b16 %v55
    %v72 = vunpack.c.l.b16 %v56
    %v73 = vunpack.c.l.b16 %v57
    %v74 = vunpack.c.l.b16 %v58
    %v75 = vpack.c.b16 %v72, %v71
    %v76 = vpack.c.b16 %v74, %v73
    %vm79 = vcmask 261120
    %v81 = vsel %vm79, %v60, 0
    %83 = vmatprep.subr.bf16.mxu0 0
    %84 = vmatpush1.bf16.msra.mxu0 0
    %85 = vmatprep.subr.bf16.mxu0 0
    %86 = vmatpush1.bf16.msra.mxu0 0
    %87 = vmatprep.subr.bf16.mxu0 0
    %88 = vmatpush1.bf16.msra.mxu0 0
    %89 = vmatprep.subr.bf16.mxu0 0
    %90 = vmatpush1.bf16.msra.mxu0 0
    %91 = vmatprep.subr.bf16.mxu0 0
    %92 = vmatpush1.bf16.msra.mxu0 0
    %93 = vmatprep.subr.bf16.mxu0 0
    %94 = vmatpush1.bf16.msra.mxu0 0
    %95 = vmatprep.subr.bf16.mxu0 0
    %96 = vmatpush1.bf16.msra.mxu0 %v76
    %97 = vmatprep.subr.bf16.mxu0 0
    %98 = vmatpush1.bf16.msra.mxu0 %v75
    %99 = vmatprep.subr.bf16.mxu0 0
    %100 = vmatpush2.bf16.msra.mxu0 0
    %101 = vmatprep.subr.bf16.mxu0 0
    %102 = vmatpush2.bf16.msra.mxu0 0
    %103 = vmatprep.subr.bf16.mxu0 0
    %104 = vmatpush2.bf16.msra.mxu0 0
    %105 = vmatprep.subr.bf16.mxu0 0
    %106 = vmatpush2.bf16.msra.mxu0 0
    %107 = vmatprep.subr.bf16.mxu0 0
    %108 = vmatpush2.bf16.msra.mxu0 0
    %109 = vmatprep.subr.bf16.mxu0 0
    %110 = vmatpush2.bf16.msra.mxu0 0
    %111 = vmatprep.subr.bf16.mxu0 0
    %112 = vmatpush2.bf16.msra.mxu0 0
    %113 = vmatprep.subr.bf16.mxu0 0
    %114 = vmatpush2.bf16.msra.mxu0 0
    %115 = vmatprep.mubr.bf16.mxu0 0
    %116 = vmatmul.mubr.bf16.gmra.mxu0 %v81
    %v117 = vpop.f32.mrf.mxu0
    %v118 = vadd.f32 %v65, %v117
    %v119 = vpop.f32.mrf.mxu0
    %v120 = vpop.f32.mrf.mxu0
    %v121 = vpop.f32.mrf.mxu0
    %122 = vdwg.mxu0
    %v123 = vmax.f32 %v118, 0.0
    %v124 = vpack.c.bf16 %v123, %v123
    %v125 = vld [vmem:[%s3] sm:$0xf]
    %v126 = vld [vmem:[%s3 + $0x4] sm:$0xf]
    %v127 = vld [vmem:[%s3 + $0x8] sm:$0xf]
    %v128 = vld [vmem:[%s3 + $0xc] sm:$0xf]
    %v129 = vld [vmem:[%s3 + $0x10] sm:$0xf]
    %v130 = vld [vmem:[%s3 + $0x14] sm:$0xf]
    %v131 = vld [vmem:[%s3 + $0x18] sm:$0xf]
    %v132 = vld [vmem:[%s3 + $0x1c] sm:$0xf]
    %v133 = vld [vmem:[#allocation5] sm:$0x1]
    %v135 = vlaneseq
    %v136 = vshrl.u32 %v135, 7
    %v137 = vsub.s32 0, %v136
    %v138 = vrot.slane %v133, %v137
    %v148 = vunpack.c.l.b16 %v125
    %v149 = vunpack.c.l.b16 %v126
    %v150 = vunpack.c.l.b16 %v127
    %v151 = vunpack.c.l.b16 %v128
    %v152 = vunpack.c.l.b16 %v129
    %v153 = vunpack.c.l.b16 %v130
    %v154 = vunpack.c.l.b16 %v131
    %v155 = vunpack.c.l.b16 %v132
    %v156 = vpack.c.b16 %v149, %v148
    %v157 = vpack.c.b16 %v151, %v150
    %v158 = vpack.c.b16 %v153, %v152
    %v159 = vpack.c.b16 %v155, %v154
    %vm164 = vcmask 523264
    %v166 = vsel %vm164, %v124, 0
    %168 = vmatprep.subr.bf16.mxu0 0
    %169 = vmatpush1.bf16.msra.mxu0 0
    %170 = vmatprep.subr.bf16.mxu0 0
    %171 = vmatpush1.bf16.msra.mxu0 0
    %172 = vmatprep.subr.bf16.mxu0 0
    %173 = vmatpush1.bf16.msra.mxu0 0
    %174 = vmatprep.subr.bf16.mxu0 0
    %175 = vmatpush1.bf16.msra.mxu0 0
    %176 = vmatprep.subr.bf16.mxu0 0
    %177 = vmatpush1.bf16.msra.mxu0 %v159
    %178 = vmatprep.subr.bf16.mxu0 0
    %179 = vmatpush1.bf16.msra.mxu0 %v158
    %180 = vmatprep.subr.bf16.mxu0 0
    %181 = vmatpush1.bf16.msra.mxu0 %v157
    %182 = vmatprep.subr.bf16.mxu0 0
    %183 = vmatpush1.bf16.msra.mxu0 %v156
    %184 = vmatprep.subr.bf16.mxu0 0
    %185 = vmatpush2.bf16.msra.mxu0 0
    %186 = vmatprep.subr.bf16.mxu0 0
    %187 = vmatpush2.bf16.msra.mxu0 0
    %188 = vmatprep.subr.bf16.mxu0 0
    %189 = vmatpush2.bf16.msra.mxu0 0
    %190 = vmatprep.subr.bf16.mxu0 0
    %191 = vmatpush2.bf16.msra.mxu0 0
    %192 = vmatprep.subr.bf16.mxu0 0
    %193 = vmatpush2.bf16.msra.mxu0 0
    %194 = vmatprep.subr.bf16.mxu0 0
    %195 = vmatpush2.bf16.msra.mxu0 0
    %196 = vmatprep.subr.bf16.mxu0 0
    %197 = vmatpush2.bf16.msra.mxu0 0
    %198 = vmatprep.subr.bf16.mxu0 0
    %199 = vmatpush2.bf16.msra.mxu0 0
    %200 = vmatprep.mubr.bf16.mxu0 0
    %201 = vmatmul.mubr.bf16.gmra.mxu0 %v166
    %v202 = vpop.f32.mrf.mxu0
    %v203 = vadd.f32 %v138, %v202
    %v204 = vpop.f32.mrf.mxu0
    %v205 = vpop.f32.mrf.mxu0
    %v206 = vpop.f32.mrf.mxu0
    %207 = vdwg.mxu0
    %v208 = vmax.f32 %v203, 0.0
    %v209 = vpack.c.bf16 %v208, %v208
    %v210 = vld [vmem:[%s5] sm:$0xf]
    %v211 = vld [vmem:[%s5 + $0x4] sm:$0xf]
    %v212 = vld [vmem:[%s5 + $0x8] sm:$0xf]
    %v213 = vld [vmem:[%s5 + $0xc] sm:$0xf]
    %v214 = vld [vmem:[%s5 + $0x10] sm:$0xf]
    %v215 = vld [vmem:[%s5 + $0x14] sm:$0xf]
    %v216 = vld [vmem:[%s5 + $0x18] sm:$0xf]
    %v217 = vld [vmem:[%s5 + $0x1c] sm:$0xf]
    %v218 = vld [vmem:[%s6] sm:$0x1]
    %v220 = vlaneseq
    %v221 = vshrl.u32 %v220, 7
    %v222 = vsub.s32 0, %v221
    %v223 = vrot.slane %v218, %v222
    %v233 = vunpack.c.l.b16 %v210
    %v234 = vunpack.c.l.b16 %v211
    %v235 = vunpack.c.l.b16 %v212
    %v236 = vunpack.c.l.b16 %v213
    %v237 = vunpack.c.l.b16 %v214
    %v238 = vunpack.c.l.b16 %v215
    %v239 = vunpack.c.l.b16 %v216
    %v240 = vunpack.c.l.b16 %v217
    %v241 = vpack.c.b16 %v234, %v233
    %v242 = vpack.c.b16 %v236, %v235
    %v243 = vpack.c.b16 %v238, %v237
    %v244 = vpack.c.b16 %v240, %v239
    %v250 = vsel %vm164, %v209, 0
    %252 = vmatprep.subr.bf16.mxu0 0
    %253 = vmatpush1.bf16.msra.mxu0 0
    %254 = vmatprep.subr.bf16.mxu0 0
    %255 = vmatpush1.bf16.msra.mxu0 0
    %256 = vmatprep.subr.bf16.mxu0 0
    %257 = vmatpush1.bf16.msra.mxu0 0
    %258 = vmatprep.subr.bf16.mxu0 0
    %259 = vmatpush1.bf16.msra.mxu0 0
    %260 = vmatprep.subr.bf16.mxu0 0
    %261 = vmatpush1.bf16.msra.mxu0 %v244
    %262 = vmatprep.subr.bf16.mxu0 0
    %263 = vmatpush1.bf16.msra.mxu0 %v243
    %264 = vmatprep.subr.bf16.mxu0 0
    %265 = vmatpush1.bf16.msra.mxu0 %v242
    %266 = vmatprep.subr.bf16.mxu0 0
    %267 = vmatpush1.bf16.msra.mxu0 %v241
    %268 = vmatprep.subr.bf16.mxu0 0
    %269 = vmatpush2.bf16.msra.mxu0 0
    %270 = vmatprep.subr.bf16.mxu0 0
    %271 = vmatpush2.bf16.msra.mxu0 0
    %272 = vmatprep.subr.bf16.mxu0 0
    %273 = vmatpush2.bf16.msra.mxu0 0
    %274 = vmatprep.subr.bf16.mxu0 0
    %275 = vmatpush2.bf16.msra.mxu0 0
    %276 = vmatprep.subr.bf16.mxu0 0
    %277 = vmatpush2.bf16.msra.mxu0 0
    %278 = vmatprep.subr.bf16.mxu0 0
    %279 = vmatpush2.bf16.msra.mxu0 0
    %280 = vmatprep.subr.bf16.mxu0 0
    %281 = vmatpush2.bf16.msra.mxu0 0
    %282 = vmatprep.subr.bf16.mxu0 0
    %283 = vmatpush2.bf16.msra.mxu0 0
    %284 = vmatprep.mubr.bf16.mxu0 0
    %285 = vmatmul.mubr.bf16.gmra.mxu0 %v250
    %v286 = vpop.f32.mrf.mxu0
    %v287 = vadd.f32 %v223, %v286
    %v288 = vpop.f32.mrf.mxu0
    %v289 = vpop.f32.mrf.mxu0
    %v290 = vpop.f32.mrf.mxu0
    %291 = vdwg.mxu0
    %vm292 = vcmask 130048
    %293 = vst.msk [vmem:[#allocation7] sm:$0xff] %vm292, %v287
    // Predicated region
    $region38: #{tpu_custom_call.1} parent=1 // pred_check
      _
    $region39: #{tpu_custom_call.1} parent=1 // pred_check_branch
      %295 = sbr.rel (0) target = $region41
    $region40: #{tpu_custom_call.1} parent=1 // pred_region
      %s297 = ssub.s32 128, 128
      %298 = vsyncadd [#allocation4], %s297
      %s300 = sshll.u32 [#allocation7], 4
      %s301 = int_to_ptr.vmem [resolvable:$true] %s300
      %303 = dma.vmem_to_hbm [thread:$0]  %s301, 128, %s7, [#allocation4]
    $region41: #{tpu_custom_call.1} parent=1 // pred_fallthru
      _
    // Predicated region
    $region42: #{tpu_custom_call.1} parent=1 // pred_check
      _
    $region43: #{tpu_custom_call.1} parent=1 // pred_check_branch
      %305 = sbr.rel (0) target = $region45
    $region44: #{tpu_custom_call.1} parent=1 // pred_region
      %306 = dma.done [#allocation4], 128
    $region45: #{tpu_custom_call.1} parent=1 // pred_fallthru
      _
    %307 = vsyncpa [#allocation3], 1
    %308 = vsyncpa [#allocation6], 1
    %309 = vsyncpa [#allocation4], 1

// kernel: tpu_custom_call.1
$region0: #{tpu_custom_call.1}
  #allocation0 [shape = 'u32[]', space=smem, size = 0x4, offset = 0x4, fixed_abs, tag = 'smem constant byte address 0x4 - core index']
  #allocation1 [shape = 'u32[144,128]{1,0:T(1,128)}', space=vmem, size = 0x12000, scoped, tag = 'internal scratch']
  %s0 = inlined_call_operand.vmem [shape: f32[8,32], index: 0, kind: input, shape index: {}]
  %s1 = inlined_call_operand.hbm [shape: bf16[32,64], index: 1, kind: input, shape index: {}]
  %s2 = inlined_call_operand.vmem [shape: f32[1,64], index: 2, kind: input, shape index: {}]
  %s3 = inlined_call_operand.vmem [shape: bf16[64,64], index: 3, kind: input, shape index: {}]
  %s4 = inlined_call_operand.hbm [shape: f32[1,64], index: 4, kind: input, shape index: {}]
  %s5 = inlined_call_operand.vmem [shape: bf16[64,16], index: 5, kind: input, shape index: {}]
  %s6 = inlined_call_operand.vmem [shape: f32[1,16], index: 6, kind: input, shape index: {}]
  %s7 = inlined_call_operand.hbm [shape: f32[8,16], index: 7, kind: output, shape index: {}]
  %s8 = sld [smem:[#allocation0]]
  $region46: #{tpu_custom_call.1} parent=0
    _
  %s10 = ssub.s32 1, %s8
  %s11 = scalar_select 0, %s10, %s8
  $region1: #{tpu_custom_call.1} parent=0
    #allocation2 [shape = 'u8[8192]{0}', space=vmem, size = 0x2000, scoped, tag = 'input window, operand 1, single buffered']
    #allocation3 [shape = 's32[1]{0}', space=sflag, size = 0x4, scoped, tag = 'scoped memory for tpu_custom_call.1']
    #allocation4 [shape = 's32[1]{0}', space=sflag, size = 0x4, scoped, tag = 'scoped memory for tpu_custom_call.1']
    #allocation5 [shape = 'u8[512]{0}', space=vmem, size = 0x400, scoped, tag = 'input window, operand 4, single buffered']
    #allocation6 [shape = 's32[1]{0}', space=sflag, size = 0x4, scoped, tag = 'scoped memory for tpu_custom_call.1']
    #allocation7 [shape = 'u8[4096]{0}', space=vmem, size = 0x1000, scoped, tag = 'output window, operand 0, single buffered']
    %12 = vsyncpa [#allocation3], 0
    %13 = vsyncpa [#allocation6], 0
    %14 = vsyncpa [#allocation4], 0
    // Predicated region
    $region2: #{tpu_custom_call.1} parent=1 // pred_check
      _
    $region3: #{tpu_custom_call.1} parent=1 // pred_check_branch
      %16 = sbr.rel (0) target = $region5
    $region4: #{tpu_custom_call.1} parent=1 // pred_region
      _
    $region5: #{tpu_custom_call.1} parent=1 // pred_fallthru
      _
    // Predicated region
    $region6: #{tpu_custom_call.1} parent=1 // pred_check
      _
    $region7: #{tpu_custom_call.1} parent=1 // pred_check_branch
      %18 = sbr.rel (0) target = $region9
    $region8: #{tpu_custom_call.1} parent=1 // pred_region
      %s20 = ssub.s32 256, 256
      %21 = vsyncadd [#allocation3], %s20
      %s22 = sshll.u32 [#allocation2], 4
      %s23 = int_to_ptr.vmem [resolvable:$true] %s22
      %28 = dma.hbm_to_vmem [thread:$0]  %s1, 256, %s23, [#allocation3], 64, 64, 4
    $region9: #{tpu_custom_call.1} parent=1 // pred_fallthru
      _
    // Predicated region
    $region10: #{tpu_custom_call.1} parent=1 // pred_check
      _
    $region11: #{tpu_custom_call.1} parent=1 // pred_check_branch
      %30 = sbr.rel (0) target = $region13
    $region12: #{tpu_custom_call.1} parent=1 // pred_region
      _
    $region13: #{tpu_custom_call.1} parent=1 // pred_fallthru
      _
    // Predicated region
    $region14: #{tpu_custom_call.1} parent=1 // pred_check
      _
    $region15: #{tpu_custom_call.1} parent=1 // pred_check_branch
      %32 = sbr.rel (0) target = $region17
    $region16: #{tpu_custom_call.1} parent=1 // pred_region
      _
    $region17: #{tpu_custom_call.1} parent=1 // pred_fallthru
      _
    // Predicated region
    $region18: #{tpu_custom_call.1} parent=1 // pred_check
      _
    $region19: #{tpu_custom_call.1} parent=1 // pred_check_branch
      %34 = sbr.rel (0) target = $region21
    $region20: #{tpu_custom_call.1} parent=1 // pred_region
      %s36 = ssub.s32 16, 16
      %37 = vsyncadd [#allocation6], %s36
      %s39 = sshll.u32 [#allocation5], 4
      %s40 = int_to_ptr.vmem [resolvable:$true] %s39
      %42 = dma.hbm_to_vmem [thread:$0]  %s4, 16, %s40, [#allocation6]
    $region21: #{tpu_custom_call.1} parent=1 // pred_fallthru
      _
    // Predicated region
    $region22: #{tpu_custom_call.1} parent=1 // pred_check
      _
    $region23: #{tpu_custom_call.1} parent=1 // pred_check_branch
      %44 = sbr.rel (0) target = $region25
    $region24: #{tpu_custom_call.1} parent=1 // pred_region
      _
    $region25: #{tpu_custom_call.1} parent=1 // pred_fallthru
      _
    // Predicated region
    $region26: #{tpu_custom_call.1} parent=1 // pred_check
      _
    $region27: #{tpu_custom_call.1} parent=1 // pred_check_branch
      %46 = sbr.rel (0) target = $region29
    $region28: #{tpu_custom_call.1} parent=1 // pred_region
      _
    $region29: #{tpu_custom_call.1} parent=1 // pred_fallthru
      _
    // Predicated region
    $region30: #{tpu_custom_call.1} parent=1 // pred_check
      _
    $region31: #{tpu_custom_call.1} parent=1 // pred_check_branch
      %48 = sbr.rel (0) target = $region33
    $region32: #{tpu_custom_call.1} parent=1 // pred_region
      %49 = dma.done [#allocation3], 256
    $region33: #{tpu_custom_call.1} parent=1 // pred_fallthru
      _
    // Predicated region
    $region34: #{tpu_custom_call.1} parent=1 // pred_check
      _
    $region35: #{tpu_custom_call.1} parent=1 // pred_check_branch
      %51 = sbr.rel (0) target = $region37
    $region36: #{tpu_custom_call.1} parent=1 // pred_region
      %52 = dma.done [#allocation6], 16
    $region37: #{tpu_custom_call.1} parent=1 // pred_fallthru
      _
    %v54 = vld [vmem:[%s0] sm:$0xff]
    %v55 = vld [vmem:[#allocation2] sm:$0xf]
    %v56 = vld [vmem:[#allocation2 + $0x4] sm:$0xf]
    %v57 = vld [vmem:[#allocation2 + $0x8] sm:$0xf]
    %v58 = vld [vmem:[#allocation2 + $0xc] sm:$0xf]
    %v59 = vld [vmem:[%s2] sm:$0x1]
    %v60 = vpack.c.bf16 %v54, %v54
    %v62 = vlaneseq
    %v63 = vshrl.u32 %v62, 7
    %v64 = vsub.s32 0, %v63
    %v65 = vrot.slane %v59, %v64
    %v71 = vunpack.c.l.b16 %v55
    %v72 = vunpack.c.l.b16 %v56
    %v73 = vunpack.c.l.b16 %v57
    %v74 = vunpack.c.l.b16 %v58
    %v75 = vpack.c.b16 %v72, %v71
    %v76 = vpack.c.b16 %v74, %v73
    %vm79 = vcmask 261120
    %v81 = vsel %vm79, %v60, 0
    %83 = vmatprep.subr.bf16.mxu0 0
    %84 = vmatpush1.bf16.msra.mxu0 0
    %85 = vmatprep.subr.bf16.mxu0 0
    %86 = vmatpush1.bf16.msra.mxu0 0
    %87 = vmatprep.subr.bf16.mxu0 0
    %88 = vmatpush1.bf16.msra.mxu0 0
    %89 = vmatprep.subr.bf16.mxu0 0
    %90 = vmatpush1.bf16.msra.mxu0 0
    %91 = vmatprep.subr.bf16.mxu0 0
    %92 = vmatpush1.bf16.msra.mxu0 0
    %93 = vmatprep.subr.bf16.mxu0 0
    %94 = vmatpush1.bf16.msra.mxu0 0
    %95 = vmatprep.subr.bf16.mxu0 0
    %96 = vmatpush1.bf16.msra.mxu0 %v76
    %97 = vmatprep.subr.bf16.mxu0 0
    %98 = vmatpush1.bf16.msra.mxu0 %v75
    %99 = vmatprep.subr.bf16.mxu0 0
    %100 = vmatpush2.bf16.msra.mxu0 0
    %101 = vmatprep.subr.bf16.mxu0 0
    %102 = vmatpush2.bf16.msra.mxu0 0
    %103 = vmatprep.subr.bf16.mxu0 0
    %104 = vmatpush2.bf16.msra.mxu0 0
    %105 = vmatprep.subr.bf16.mxu0 0
    %106 = vmatpush2.bf16.msra.mxu0 0
    %107 = vmatprep.subr.bf16.mxu0 0
    %108 = vmatpush2.bf16.msra.mxu0 0
    %109 = vmatprep.subr.bf16.mxu0 0
    %110 = vmatpush2.bf16.msra.mxu0 0
    %111 = vmatprep.subr.bf16.mxu0 0
    %112 = vmatpush2.bf16.msra.mxu0 0
    %113 = vmatprep.subr.bf16.mxu0 0
    %114 = vmatpush2.bf16.msra.mxu0 0
    %115 = vmatprep.mubr.bf16.mxu0 0
    %116 = vmatmul.mubr.bf16.gmra.mxu0 %v81
    %v117 = vpop.f32.mrf.mxu0
    %v118 = vadd.f32 %v65, %v117
    %v119 = vpop.f32.mrf.mxu0
    %v120 = vpop.f32.mrf.mxu0
    %v121 = vpop.f32.mrf.mxu0
    %122 = vdwg.mxu0
    %v123 = vmax.f32 %v118, 0.0
    %v124 = vpack.c.bf16 %v123, %v123
    %v125 = vld [vmem:[%s3] sm:$0xf]
    %v126 = vld [vmem:[%s3 + $0x4] sm:$0xf]
    %v127 = vld [vmem:[%s3 + $0x8] sm:$0xf]
    %v128 = vld [vmem:[%s3 + $0xc] sm:$0xf]
    %v129 = vld [vmem:[%s3 + $0x10] sm:$0xf]
    %v130 = vld [vmem:[%s3 + $0x14] sm:$0xf]
    %v131 = vld [vmem:[%s3 + $0x18] sm:$0xf]
    %v132 = vld [vmem:[%s3 + $0x1c] sm:$0xf]
    %v133 = vld [vmem:[#allocation5] sm:$0x1]
    %v135 = vlaneseq
    %v136 = vshrl.u32 %v135, 7
    %v137 = vsub.s32 0, %v136
    %v138 = vrot.slane %v133, %v137
    %v148 = vunpack.c.l.b16 %v125
    %v149 = vunpack.c.l.b16 %v126
    %v150 = vunpack.c.l.b16 %v127
    %v151 = vunpack.c.l.b16 %v128
    %v152 = vunpack.c.l.b16 %v129
    %v153 = vunpack.c.l.b16 %v130
    %v154 = vunpack.c.l.b16 %v131
    %v155 = vunpack.c.l.b16 %v132
    %v156 = vpack.c.b16 %v149, %v148
    %v157 = vpack.c.b16 %v151, %v150
    %v158 = vpack.c.b16 %v153, %v152
    %v159 = vpack.c.b16 %v155, %v154
    %vm164 = vcmask 523264
    %v166 = vsel %vm164, %v124, 0
    %168 = vmatprep.subr.bf16.mxu0 0
    %169 = vmatpush1.bf16.msra.mxu0 0
    %170 = vmatprep.subr.bf16.mxu0 0
    %171 = vmatpush1.bf16.msra.mxu0 0
    %172 = vmatprep.subr.bf16.mxu0 0
    %173 = vmatpush1.bf16.msra.mxu0 0
    %174 = vmatprep.subr.bf16.mxu0 0
    %175 = vmatpush1.bf16.msra.mxu0 0
    %176 = vmatprep.subr.bf16.mxu0 0
    %177 = vmatpush1.bf16.msra.mxu0 %v159
    %178 = vmatprep.subr.bf16.mxu0 0
    %179 = vmatpush1.bf16.msra.mxu0 %v158
    %180 = vmatprep.subr.bf16.mxu0 0
    %181 = vmatpush1.bf16.msra.mxu0 %v157
    %182 = vmatprep.subr.bf16.mxu0 0
    %183 = vmatpush1.bf16.msra.mxu0 %v156
    %184 = vmatprep.subr.bf16.mxu0 0
    %185 = vmatpush2.bf16.msra.mxu0 0
    %186 = vmatprep.subr.bf16.mxu0 0
    %187 = vmatpush2.bf16.msra.mxu0 0
    %188 = vmatprep.subr.bf16.mxu0 0
    %189 = vmatpush2.bf16.msra.mxu0 0
    %190 = vmatprep.subr.bf16.mxu0 0
    %191 = vmatpush2.bf16.msra.mxu0 0
    %192 = vmatprep.subr.bf16.mxu0 0
    %193 = vmatpush2.bf16.msra.mxu0 0
    %194 = vmatprep.subr.bf16.mxu0 0
    %195 = vmatpush2.bf16.msra.mxu0 0
    %196 = vmatprep.subr.bf16.mxu0 0
    %197 = vmatpush2.bf16.msra.mxu0 0
    %198 = vmatprep.subr.bf16.mxu0 0
    %199 = vmatpush2.bf16.msra.mxu0 0
    %200 = vmatprep.mubr.bf16.mxu0 0
    %201 = vmatmul.mubr.bf16.gmra.mxu0 %v166
    %v202 = vpop.f32.mrf.mxu0
    %v203 = vadd.f32 %v138, %v202
    %v204 = vpop.f32.mrf.mxu0
    %v205 = vpop.f32.mrf.mxu0
    %v206 = vpop.f32.mrf.mxu0
    %207 = vdwg.mxu0
    %v208 = vmax.f32 %v203, 0.0
    %v209 = vpack.c.bf16 %v208, %v208
    %v210 = vld [vmem:[%s5] sm:$0xf]
    %v211 = vld [vmem:[%s5 + $0x4] sm:$0xf]
    %v212 = vld [vmem:[%s5 + $0x8] sm:$0xf]
    %v213 = vld [vmem:[%s5 + $0xc] sm:$0xf]
    %v214 = vld [vmem:[%s5 + $0x10] sm:$0xf]
    %v215 = vld [vmem:[%s5 + $0x14] sm:$0xf]
    %v216 = vld [vmem:[%s5 + $0x18] sm:$0xf]
    %v217 = vld [vmem:[%s5 + $0x1c] sm:$0xf]
    %v218 = vld [vmem:[%s6] sm:$0x1]
    %v220 = vlaneseq
    %v221 = vshrl.u32 %v220, 7
    %v222 = vsub.s32 0, %v221
    %v223 = vrot.slane %v218, %v222
    %v233 = vunpack.c.l.b16 %v210
    %v234 = vunpack.c.l.b16 %v211
    %v235 = vunpack.c.l.b16 %v212
    %v236 = vunpack.c.l.b16 %v213
    %v237 = vunpack.c.l.b16 %v214
    %v238 = vunpack.c.l.b16 %v215
    %v239 = vunpack.c.l.b16 %v216
    %v240 = vunpack.c.l.b16 %v217
    %v241 = vpack.c.b16 %v234, %v233
    %v242 = vpack.c.b16 %v236, %v235
    %v243 = vpack.c.b16 %v238, %v237
    %v244 = vpack.c.b16 %v240, %v239
    %v250 = vsel %vm164, %v209, 0
    %252 = vmatprep.subr.bf16.mxu0 0
    %253 = vmatpush1.bf16.msra.mxu0 0
    %254 = vmatprep.subr.bf16.mxu0 0
    %255 = vmatpush1.bf16.msra.mxu0 0
    %256 = vmatprep.subr.bf16.mxu0 0
    %257 = vmatpush1.bf16.msra.mxu0 0
    %258 = vmatprep.subr.bf16.mxu0 0
    %259 = vmatpush1.bf16.msra.mxu0 0
    %260 = vmatprep.subr.bf16.mxu0 0
    %261 = vmatpush1.bf16.msra.mxu0 %v244
    %262 = vmatprep.subr.bf16.mxu0 0
    %263 = vmatpush1.bf16.msra.mxu0 %v243
    %264 = vmatprep.subr.bf16.mxu0 0
    %265 = vmatpush1.bf16.msra.mxu0 %v242
    %266 = vmatprep.subr.bf16.mxu0 0
    %267 = vmatpush1.bf16.msra.mxu0 %v241
    %268 = vmatprep.subr.bf16.mxu0 0
    %269 = vmatpush2.bf16.msra.mxu0 0
    %270 = vmatprep.subr.bf16.mxu0 0
    %271 = vmatpush2.bf16.msra.mxu0 0
    %272 = vmatprep.subr.bf16.mxu0 0
    %273 = vmatpush2.bf16.msra.mxu0 0
    %274 = vmatprep.subr.bf16.mxu0 0
    %275 = vmatpush2.bf16.msra.mxu0 0
    %276 = vmatprep.subr.bf16.mxu0 0
    %277 = vmatpush2.bf16.msra.mxu0 0
    %278 = vmatprep.subr.bf16.mxu0 0
    %279 = vmatpush2.bf16.msra.mxu0 0
    %280 = vmatprep.subr.bf16.mxu0 0
    %281 = vmatpush2.bf16.msra.mxu0 0
    %282 = vmatprep.subr.bf16.mxu0 0
    %283 = vmatpush2.bf16.msra.mxu0 0
    %284 = vmatprep.mubr.bf16.mxu0 0
    %285 = vmatmul.mubr.bf16.gmra.mxu0 %v250
    %v286 = vpop.f32.mrf.mxu0
    %v287 = vadd.f32 %v223, %v286
    %v288 = vpop.f32.mrf.mxu0
    %v289 = vpop.f32.mrf.mxu0
    %v290 = vpop.f32.mrf.mxu0
    %291 = vdwg.mxu0
    %vm292 = vcmask 130048
    %293 = vst.msk [vmem:[#allocation7] sm:$0xff] %vm292, %v287
    // Predicated region
    $region38: #{tpu_custom_call.1} parent=1 // pred_check
      _
    $region39: #{tpu_custom_call.1} parent=1 // pred_check_branch
      %295 = sbr.rel (0) target = $region41
    $region40: #{tpu_custom_call.1} parent=1 // pred_region
      %s297 = ssub.s32 128, 128
      %298 = vsyncadd [#allocation4], %s297
      %s300 = sshll.u32 [#allocation7], 4
      %s301 = int_to_ptr.vmem [resolvable:$true] %s300
      %303 = dma.vmem_to_hbm [thread:$0]  %s301, 128, %s7, [#allocation4]
    $region41: #{tpu_custom_call.1} parent=1 // pred_fallthru
      _
    // Predicated region
    $region42: #{tpu_custom_call.1} parent=1 // pred_check
      _
    $region43: #{tpu_custom_call.1} parent=1 // pred_check_branch
      %305 = sbr.rel (0) target = $region45
    $region44: #{tpu_custom_call.1} parent=1 // pred_region
      %306 = dma.done [#allocation4], 128
    $region45: #{tpu_custom_call.1} parent=1 // pred_fallthru
      _
    %307 = vsyncpa [#allocation3], 1
    %308 = vsyncpa [#allocation6], 1
    %309 = vsyncpa [#allocation4], 1

</llo_original>
